<compile_context>
chip_gen: v7x
topology: tpu7x:2x2x1
jax: 0.10.0
libtpu: 0.0.40
codegen_flags: <defaults>
</compile_context>

<pallas_src>
import functools
import math

import jax
import jax.numpy as jnp
from jax import lax
from jax.experimental import pallas as pl
from jax.experimental.pallas import tpu as pltpu


def _attngate_gate_kernel(qp_ref, k_ref, amask_ref, out_ref, scores_ref,
                          *, scale, threshold):
    # qp_ref    : VMEM (1, H, Dg)      f32   projected query (HeadPoolingLinear output)
    # k_ref     : VMEM (1, H, St, Dg)  f32/bf16  compressed-K tile (blocks [s*St, s*St+St))
    # amask_ref : VMEM (1, Hm, St)     i32   attention mask tile (1 = attend), Hm in {1, H}
    # out_ref   : VMEM (1, nS, H, St)  i32   keep mask, resident across the S grid axis
    # scores_ref: VMEM (nS, H, St)     f32   scratch: masked, scaled gate scores
    s_idx = pl.program_id(1)
    nS, H, St = scores_ref.shape

    qp = qp_ref[0].astype(jnp.float32)                 # (H, Dg)
    k = k_ref[0].astype(jnp.float32)                   # (H, St, Dg)

    # Gate attention einsum('bhd,bshd->bhs'): per-head batched MXU matmul contracting
    # the gate-hidden dim, f32 accumulation (review: no VPU mul + XLU reduce).
    attn = jnp.einsum('hqd,hsd->hqs', qp[:, None, :], k,
                      preferred_element_type=jnp.float32)[:, 0, :]   # (H, St)
    attn = attn * scale

    # masked_fill(~mask, -1e20); mask broadcasts over heads when Hm == 1.
    valid = amask_ref[0] != 0                          # (Hm, St)
    attn = jnp.where(valid, attn, jnp.float32(-1e20))

    scores_ref[s_idx] = attn                           # stash this tile's scores

    # Finalize once all S tiles of this batch element have been scored.
    @pl.when(s_idx == nS - 1)
    def _finalize():
        s = scores_ref[...]                                            # (nS, H, St)
        m = jnp.max(jnp.max(s, axis=2, keepdims=True), axis=0, keepdims=True)   # (1,H,1)
        e = jnp.exp(s - m)
        l = jnp.sum(jnp.sum(e, axis=2, keepdims=True), axis=0, keepdims=True)   # (1,H,1)
        # softmax(s) > threshold  <=>  e > threshold * sum(e)   (division-free)
        keep = e > (threshold * l)
        # always keep the newest (last) compressed block
        tile = lax.broadcasted_iota(jnp.int32, (nS, H, St), 0)
        col = lax.broadcasted_iota(jnp.int32, (nS, H, St), 2)
        keep = jnp.logical_or(keep, jnp.logical_and(tile == nS - 1, col == St - 1))
        # int8 output would shave writeback bytes further, but the mask is ~Dg x smaller
        # than the K read, so int32 keeps the lowering simple at negligible cost.
        out_ref[0] = keep.astype(out_ref.dtype)


def _normalize_mask(attention_mask, B, S):
    """Normalize a bool mask broadcastable to (B, H, S) into (B, Hm, S) bool, Hm in {1, H}."""
    am = jnp.asarray(attention_mask)
    if am.dtype != jnp.bool_:
        am = am != 0
    if am.ndim == 1:
        am = am[None, None, :]
    elif am.ndim == 2:
        am = am[:, None, :]
    assert am.ndim == 3 and am.shape[-1] == S
    return jnp.broadcast_to(am, (B, am.shape[1], S))   # keep the head dim un-expanded


def _choose_s_tile(S, H, Dg, itemsize, max_tile_bytes=8 << 20):
    """Largest lane-dense (multiple-of-128) S tile that divides S, gives >=2 tiles and
    stays under ~8 MiB per K buffer (double-buffered -> <=16 MiB, safe for v7x)."""
    for st in (2048, 1024, 512, 256, 128):
        if S % st == 0 and S // st >= 2 and H * st * Dg * itemsize <= max_tile_bytes:
            return st
    # TODO(synk): pad/ragged-tile very long, non-128-divisible block counts.
    return S


def attn_gate_decode(q, k_compressed, attention_mask, q_weight, threshold):
    """Decode-path AttnGate forward (Qproj pooling, bool mask, threshold sparsity).

    q             : (B, 1, num_q_head, model_hidden)
    k_compressed  : (B, num_k_head, S_blocks, gate_hidden)   head-major compressed-K cache
                    (same contents as the PyTorch (B, S, H, D) cache; stored head-major by
                    the JAX-side cache glue so no per-decode-step HBM transpose is needed).
                    May be float32 or bfloat16 (bf16 halves the K DMA bytes).
    attention_mask: bool, shape (B, S) / (B, 1, S) / (B, H, S)
    q_weight      : (num_k_head, gqa_group, model_hidden, gate_hidden)
    threshold     : python float (static per compile)
    returns       : bool keep-mask of shape (B, num_k_head, S_blocks)
    """
    B = q.shape[0]
    H, G, Din, Dg = q_weight.shape
    assert q.shape == (B, 1, H * G, Din)
    assert k_compressed.shape[0] == B and k_compressed.shape[1] == H
    assert k_compressed.shape[3] == Dg
    S = k_compressed.shape[2]

    # HeadPoolingLinear ('bskgi,kgio->bsko'), hoisted: one tiny matmul per decode step,
    # keeps q_weight out of kernel VMEM.
    qp = jnp.einsum('bhgi,hgio->bho',
                    q.reshape(B, H, G, Din).astype(jnp.float32),
                    q_weight.astype(jnp.float32))                      # (B, H, Dg) f32

    amask = _normalize_mask(attention_mask, B, S).astype(jnp.int32)    # (B, Hm, S)
    Hm = amask.shape[1]

    St = _choose_s_tile(S, H, Dg, jnp.dtype(k_compressed.dtype).itemsize)
    nS = S // St

    kernel = functools.partial(_attngate_gate_kernel,
                               scale=1.0 / math.sqrt(Dg),
                               threshold=float(threshold))

    out4 = pl.pallas_call(
        kernel,
        out_shape=jax.ShapeDtypeStruct((B, nS, H, St), jnp.int32),
        grid_spec=pltpu.PrefetchScalarGridSpec(
            num_scalar_prefetch=0,
            grid=(B, nS),
            in_specs=[
                pl.BlockSpec((1, H, Dg), lambda b, s: (b, 0, 0)),        # qp (s-invariant)
                pl.BlockSpec((1, H, St, Dg), lambda b, s: (b, 0, s, 0)),  # K tile
                pl.BlockSpec((1, Hm, St), lambda b, s: (b, 0, s)),        # mask tile
            ],
            out_specs=pl.BlockSpec((1, nS, H, St), lambda b, s: (b, 0, 0, 0)),
            scratch_shapes=[pltpu.VMEM((nS, H, St), jnp.float32)],
        ),
        compiler_params=pltpu.CompilerParams(
            dimension_semantics=("parallel", "arbitrary")),
    )(qp, k_compressed, amask)

    # Layout plumbing only (tiny int array, Dg x smaller than the K read):
    # (B, nS, H, St) -> (B, H, nS*St) == (B, H, S).
    out = out4.transpose(0, 2, 1, 3).reshape(B, H, S)
    return out.astype(jnp.bool_)


def ref_attn_gate_decode(q, k_hmajor, attention_mask, q_weight, threshold):
    """Pure-JAX reference mirroring the PyTorch decode path (Qproj + bool mask + threshold)."""
    B, _, num_q_head, Din = q.shape
    H, G, _, Dg = q_weight.shape
    S = k_hmajor.shape[2]
    qk = q.reshape(B, 1, H, G, Din).astype(jnp.float32)
    qp = jnp.einsum('bskgi,kgio->bsko', qk, q_weight.astype(jnp.float32))[:, 0]  # (B,H,Dg)
    attn = jnp.einsum('bhd,bhsd->bhs', qp, k_hmajor.astype(jnp.float32))
    attn = attn * (1.0 / math.sqrt(Dg))
    amask = jnp.broadcast_to(_normalize_mask(attention_mask, B, S), attn.shape)
    attn = jnp.where(amask, attn, -1e20)
    p = jax.nn.softmax(attn, axis=-1)
    m = p > threshold
    m = m.at[:, :, -1].set(True)
    return m, p


if __name__ == "__main__":
    def run_case(B, num_k_head, gqa_group, model_hidden, gate_hidden, S,
                 threshold, masked_tail, kv_dtype, seed):
        H, G, Din, Dg = num_k_head, gqa_group, model_hidden, gate_hidden
        key = jax.random.PRNGKey(seed)
        k1, k2, k3 = jax.random.split(key, 3)

        # Deterministic xavier_uniform-style init for HeadPoolingLinear weight.
        fan_in, fan_out = G * Din, Dg
        bound = math.sqrt(6.0 / (fan_in + fan_out))
        q_weight = jax.random.uniform(k1, (H, G, Din, Dg), jnp.float32, -bound, bound)

        q = jax.random.normal(k2, (B, 1, H * G, Din), jnp.float32)
        # Head-major compressed-K cache (B, H, S_blocks, Dg); optionally bf16.
        k_comp = jax.random.normal(k3, (B, H, S, Dg), jnp.float32).astype(kv_dtype)

        # Bool attention mask at its natural (B, 1, S) shape: later batches mask a tail.
        lengths = jnp.maximum(jnp.asarray([S - masked_tail * b for b in range(B)]), 1)
        pos = jnp.arange(S)[None, :]
        attention_mask = (pos < lengths[:, None])[:, None, :]       # (B, 1, S) bool

        out = attn_gate_decode(q, k_comp, attention_mask, q_weight, threshold)
        out = jax.block_until_ready(out)

        ref_mask, ref_p = ref_attn_gate_decode(
            q, k_comp.astype(jnp.float32), attention_mask, q_weight, threshold)

        assert out.shape == ref_mask.shape and out.dtype == jnp.bool_
        mismatch = out != ref_mask
        # Tolerate float-order flips only where p is within 5e-4 of the threshold
        # (division-free compare + MXU accumulation order can flip exact-borderline blocks).
        borderline = jnp.abs(ref_p - threshold) < 5e-4
        assert bool(jnp.all(jnp.logical_or(~mismatch, borderline))), \
            f"mask mismatch vs reference (B={B}, H={H}, S={S})"

    # Case 1: module-consistent small shapes (single K tile per batch element).
    run_case(B=2, num_k_head=2, gqa_group=2, model_hidden=32, gate_hidden=32,
             S=16, threshold=0.05, masked_tail=4, kv_dtype=jnp.float32, seed=0)

    # Case 2: more cache blocks -> exercises the tiled-S pipelined path (St=128, 2 tiles)
    # with a bf16 compressed-K cache.
    run_case(B=2, num_k_head=2, gqa_group=2, model_hidden=32, gate_hidden=32,
             S=256, threshold=0.02, masked_tail=7, kv_dtype=jnp.bfloat16, seed=1)

    print("KERNEL_OK")
</pallas_src>

<mosaic_0001>
module attributes {stable_mosaic.version = 11 : i64} {
  func.func @_attngate_gate_kernel(%arg0: i32, %arg1: i32, %arg2: memref<1x2x32xf32, #tpu.memory_space<vmem>>, %arg3: memref<1x2x16x32xf32, #tpu.memory_space<vmem>>, %arg4: memref<1x1x16xi32, #tpu.memory_space<vmem>>, %arg5: memref<1x1x2x16xi32, #tpu.memory_space<vmem>>, %arg6: memref<1x2x16xf32, #tpu.memory_space<vmem>>) attributes {dimension_semantics = [#tpu.dimension_semantics<parallel>, #tpu.dimension_semantics<arbitrary>], iteration_bounds = array<i64: 2, 1>, scalar_prefetch = 0 : i64, scratch_operands = 1 : i64, tpu.core_type = #tpu.core_type<tc>, window_params = [{transform_indices = @transform_0, window_bounds = array<i64: 1, 2, 32>}, {transform_indices = @transform_1, window_bounds = array<i64: 1, 2, 16, 32>}, {transform_indices = @transform_2, window_bounds = array<i64: 1, 1, 16>}, {transform_indices = @transform_3, window_bounds = array<i64: 1, 1, 2, 16>}]} {
    %c0 = arith.constant 0 : index
    %c0_0 = arith.constant 0 : index
    %c0_1 = arith.constant 0 : index
    %0 = vector.load %arg2[%c0, %c0_0, %c0_1] : memref<1x2x32xf32, #tpu.memory_space<vmem>>, vector<1x2x32xf32>
    %1 = vector.shape_cast %0 : vector<1x2x32xf32> to vector<2x32xf32>
    %c0_2 = arith.constant 0 : index
    %c0_3 = arith.constant 0 : index
    %c0_4 = arith.constant 0 : index
    %c0_5 = arith.constant 0 : index
    %2 = vector.load %arg3[%c0_2, %c0_3, %c0_4, %c0_5] : memref<1x2x16x32xf32, #tpu.memory_space<vmem>>, vector<1x2x16x32xf32>
    %3 = vector.shape_cast %2 : vector<1x2x16x32xf32> to vector<2x16x32xf32>
    %4 = vector.shape_cast %1 : vector<2x32xf32> to vector<2x1x32xf32>
    "tpu.trace_start"() <{level = 10 : i32, message = "hqd,hsd->hqs"}> : () -> ()
    %cst = arith.constant dense<0.000000e+00> : vector<2x1x16xf32>
    %5 = tpu.matmul %4, %3, %cst {dimension_numbers = #tpu.dot_dimension_numbers<[2], [2], [1], [1], [0, 0, 0, 1, 1, 1], [0], [0]>} : vector<2x1x32xf32>, vector<2x16x32xf32>, vector<2x1x16xf32> -> vector<2x1x16xf32>
    "tpu.trace_stop"() : () -> ()
    %6 = vector.shape_cast %5 : vector<2x1x16xf32> to vector<2x16xf32>
    %cst_6 = arith.constant 0.176776692 : f32
    %7 = vector.broadcast %cst_6 : f32 to vector<2x16xf32>
    %8 = arith.mulf %6, %7 : vector<2x16xf32>
    %c0_7 = arith.constant 0 : index
    %c0_8 = arith.constant 0 : index
    %c0_9 = arith.constant 0 : index
    %9 = vector.load %arg4[%c0_7, %c0_8, %c0_9] : memref<1x1x16xi32, #tpu.memory_space<vmem>>, vector<1x1x16xi32>
    %10 = vector.shape_cast %9 : vector<1x1x16xi32> to vector<1x16xi32>
    %c0_i32 = arith.constant 0 : i32
    %11 = vector.broadcast %c0_i32 : i32 to vector<1x16xi32>
    %12 = arith.cmpi ne, %10, %11 : vector<1x16xi32>
    %cst_10 = arith.constant -1.000000e+20 : f32
    %13 = vector.shape_cast %12 : vector<1x16xi1> to vector<1x16xi1>
    %14 = vector.broadcast %13 : vector<1x16xi1> to vector<2x16xi1>
    %15 = vector.broadcast %cst_10 : f32 to vector<2x16xf32>
    %16 = arith.select %14, %8, %15 : vector<2x16xi1>, vector<2x16xf32>
    %17 = arith.index_cast %arg1 : i32 to index
    %c0_11 = arith.constant 0 : index
    %c0_12 = arith.constant 0 : index
    %18 = vector.load %arg6[%17, %c0_11, %c0_12] : memref<1x2x16xf32, #tpu.memory_space<vmem>>, vector<1x2x16xf32>
    %19 = vector.shape_cast %18 : vector<1x2x16xf32> to vector<2x16xf32>
    %20 = vector.shape_cast %16 : vector<2x16xf32> to vector<1x2x16xf32>
    tpu.vector_store %arg6[%17, %c0_11, %c0_12], %20 {strides = array<i32>} : memref<1x2x16xf32, #tpu.memory_space<vmem>>, vector<1x2x16xf32>,
    %c0_i32_13 = arith.constant 0 : i32
    %21 = arith.cmpi eq, %arg1, %c0_i32_13 : i32
    %22 = arith.extui %21 : i1 to i32
    %c0_i32_14 = arith.constant 0 : i32
    %23 = arith.cmpi ne, %22, %c0_i32_14 : i32
    scf.if %23 {
      %c0_15 = arith.constant 0 : index
      %c0_16 = arith.constant 0 : index
      %c0_17 = arith.constant 0 : index
      %24 = vector.load %arg6[%c0_15, %c0_16, %c0_17] : memref<1x2x16xf32, #tpu.memory_space<vmem>>, vector<1x2x16xf32>
      %cst_18 = arith.constant dense<0xFF800000> : vector<1x2xf32>
      %25 = vector.multi_reduction <maximumf>, %24, %cst_18 [2] : vector<1x2x16xf32> to vector<1x2xf32>
      %26 = vector.shape_cast %25 : vector<1x2xf32> to vector<1x2x1xf32>
      %cst_19 = arith.constant dense<0xFF800000> : vector<2x1xf32>
      %27 = vector.multi_reduction <maximumf>, %26, %cst_19 [0] : vector<1x2x1xf32> to vector<2x1xf32>
      %28 = vector.shape_cast %27 : vector<2x1xf32> to vector<1x2x1xf32>
      %29 = vector.broadcast %28 : vector<1x2x1xf32> to vector<1x2x16xf32>
      %30 = arith.subf %24, %29 : vector<1x2x16xf32>
      %31 = math.exp %30 : vector<1x2x16xf32>
      %cst_20 = arith.constant dense<0.000000e+00> : vector<1x2xf32>
      %32 = vector.multi_reduction <add>, %31, %cst_20 [2] : vector<1x2x16xf32> to vector<1x2xf32>
      %33 = vector.shape_cast %32 : vector<1x2xf32> to vector<1x2x1xf32>
      %cst_21 = arith.constant dense<0.000000e+00> : vector<2x1xf32>
      %34 = vector.multi_reduction <add>, %33, %cst_21 [0] : vector<1x2x1xf32> to vector<2x1xf32>
      %35 = vector.shape_cast %34 : vector<2x1xf32> to vector<1x2x1xf32>
      %cst_22 = arith.constant 5.000000e-02 : f32
      %36 = vector.broadcast %cst_22 : f32 to vector<1x2x1xf32>
      %37 = arith.mulf %36, %35 : vector<1x2x1xf32>
      %38 = vector.broadcast %37 : vector<1x2x1xf32> to vector<1x2x16xf32>
      %39 = arith.cmpf ogt, %31, %38 : vector<1x2x16xf32>
      %40 = tpu.iota {dimensions = array<i32: 0>} : vector<1x2x16xi32>
      %41 = tpu.iota {dimensions = array<i32: 2>} : vector<1x2x16xi32>
      %c0_i32_23 = arith.constant 0 : i32
      %42 = vector.broadcast %c0_i32_23 : i32 to vector<1x2x16xi32>
      %43 = arith.cmpi eq, %40, %42 : vector<1x2x16xi32>
      %c15_i32 = arith.constant 15 : i32
      %44 = vector.broadcast %c15_i32 : i32 to vector<1x2x16xi32>
      %45 = arith.cmpi eq, %41, %44 : vector<1x2x16xi32>
      %46 = arith.andi %43, %45 : vector<1x2x16xi1>
      %47 = arith.ori %39, %46 : vector<1x2x16xi1>
      %48 = arith.extui %47 : vector<1x2x16xi1> to vector<1x2x16xi32>
      %c0_24 = arith.constant 0 : index
      %c0_25 = arith.constant 0 : index
      %c0_26 = arith.constant 0 : index
      %c0_27 = arith.constant 0 : index
      %49 = vector.load %arg5[%c0_24, %c0_25, %c0_26, %c0_27] : memref<1x1x2x16xi32, #tpu.memory_space<vmem>>, vector<1x1x2x16xi32>
      %50 = vector.shape_cast %49 : vector<1x1x2x16xi32> to vector<1x2x16xi32>
      %51 = vector.shape_cast %48 : vector<1x2x16xi32> to vector<1x1x2x16xi32>
      tpu.vector_store %arg5[%c0_24, %c0_25, %c0_26, %c0_27], %51 {strides = array<i32>} : memref<1x1x2x16xi32, #tpu.memory_space<vmem>>, vector<1x1x2x16xi32>,
    } else {
    }
    return
  }
  func.func @transform_0(%arg0: i32, %arg1: i32) -> (i32, i32, i32) {
    %c0_i32 = arith.constant 0 : i32
    %c0_i32_0 = arith.constant 0 : i32
    %c0_i32_1 = arith.constant 0 : i32
    return %arg0, %c0_i32, %c0_i32_0 : i32, i32, i32
  }
  func.func @transform_1(%arg0: i32, %arg1: i32) -> (i32, i32, i32, i32) {
    %c0_i32 = arith.constant 0 : i32
    %c0_i32_0 = arith.constant 0 : i32
    %c0_i32_1 = arith.constant 0 : i32
    return %arg0, %c0_i32, %arg1, %c0_i32_0 : i32, i32, i32, i32
  }
  func.func @transform_2(%arg0: i32, %arg1: i32) -> (i32, i32, i32) {
    %c0_i32 = arith.constant 0 : i32
    %c0_i32_0 = arith.constant 0 : i32
    return %arg0, %c0_i32, %arg1 : i32, i32, i32
  }
  func.func @transform_3(%arg0: i32, %arg1: i32) -> (i32, i32, i32, i32) {
    %c0_i32 = arith.constant 0 : i32
    %c0_i32_0 = arith.constant 0 : i32
    %c0_i32_1 = arith.constant 0 : i32
    %c0_i32_2 = arith.constant 0 : i32
    return %arg0, %c0_i32, %c0_i32_0, %c0_i32_1 : i32, i32, i32, i32
  }
}

</mosaic_0001>

<llo_original>
// kernel: tpu_custom_call.1
$region0: #{tpu_custom_call.1}
  #allocation0 [shape = 'u32[]', space=smem, size = 0x4, offset = 0x4, fixed_abs, tag = 'smem constant byte address 0x4 - core index']
  #allocation1 [shape = 'u32[144,128]{1,0:T(1,128)}', space=vmem, size = 0x12000, scoped, tag = 'internal scratch']
  #allocation2 [shape = 'f32[1,2,16]{2,1,0:T(2,128)}', space=vmem, size = 0x400, scoped, tag = 'scratch operand']
  %s0 = inlined_call_operand.hbm [shape: f32[2,2,32], index: 0, kind: input, shape index: {}]
  %s1 = inlined_call_operand.hbm [shape: f32[2,2,16,32], index: 1, kind: input, shape index: {}]
  %s2 = inlined_call_operand.vmem [shape: s32[2,1,16], index: 2, kind: input, shape index: {}]
  %s3 = inlined_call_operand.hbm [shape: s32[2,1,2,16], index: 3, kind: output, shape index: {}]
  %s4 = sld [smem:[#allocation0]]
  $region57: #{tpu_custom_call.1} parent=0
    _
  %s6 = ssub.s32 1, %s4
  %s7 = scalar_select 0, %s6, %s4
  $region1: #{tpu_custom_call.1} parent=0
    #allocation3 [shape = 'u8[2048]{0}', space=vmem, size = 0x800, scoped, tag = 'input window, operand 0']
    #allocation4 [shape = 's32[2]{0}', space=sflag, size = 0x8, scoped, tag = 'scoped memory for tpu_custom_call.1']
    #allocation5 [shape = 's32[2]{0}', space=sflag, size = 0x8, scoped, tag = 'scoped memory for tpu_custom_call.1']
    #allocation6 [shape = 'u8[32768]{0}', space=vmem, size = 0x8000, scoped, tag = 'input window, operand 1']
    #allocation7 [shape = 's32[2]{0}', space=sflag, size = 0x8, scoped, tag = 'scoped memory for tpu_custom_call.1']
    #allocation8 [shape = 'u8[2048]{0}', space=vmem, size = 0x800, scoped, tag = 'output window, operand 0']
    %8 = vsyncpa [#allocation4], 0
    %s9 = scalar_lea.sflag [#allocation4], 1
    %10 = vsyncpa %s9, 0
    %11 = vsyncpa [#allocation7], 0
    %s12 = scalar_lea.sflag [#allocation7], 1
    %13 = vsyncpa %s12, 0
    %14 = vsyncpa [#allocation5], 0
    %s15 = scalar_lea.sflag [#allocation5], 1
    %16 = vsyncpa %s15, 0
    loop: start=0, step=1, limit=4
    $region2: #{tpu_custom_call.1} parent=1 // loop_pre_header
      _
    $region3: #{tpu_custom_call.1} parent=1 // loop_header
      %s18 = sphi 0, %s22
      %p19 = scmp.ge.s32.totalorder %s18, 4
      %s25 = sphi 0, %s37
      %s26 = sphi 0, %s33
      %s27 = sphi 0, %s25
      %s28 = sphi 0, %s26
      %s29 = sphi 0, %s27
      %s30 = sphi 0, %s28
      %s40 = sphi 0, %s42
      %s43 = sphi 0, %s40
      %s44 = sphi 0, %s43
      %s60 = sphi 0, %s44
      %s68 = sphi 0, %s70
      %s71 = sphi 0, %s68
      %s72 = sphi 0, %s71
      %s88 = sphi 0, %s72
      %s96 = sphi 0, %s98
      %s99 = sphi 0, %s96
      %s100 = sphi 0, %s99
      %s116 = sphi 0, %s100
      %s122 = sphi 0, %s124
      %s125 = sphi 0, %s122
      %s126 = sphi 0, %s125
      %s142 = sphi 0, %s126
    $region4: #{tpu_custom_call.1} parent=1 // loop_header_branch
      %21 = sbr.rel (%p19) target = $region8
    $region5: #{tpu_custom_call.1} parent=1 // loop_body
      %s23 = ssub.s32 %s18, 1
      %s24 = ssub.s32 %s18, 2
      %s31 = sadd.s32 1, %s26
      %p32 = scmp.ge.s32.totalorder %s31, 1
      %s33 = scalar_select %p32, 0, %s31
      %s34 = sadd.s32 1, %s25
      %s35 = scalar_select %p32, %s34, %s25
      %p36 = scmp.ge.s32.totalorder %s35, 2
      %s37 = scalar_select %p36, 0, %s35
      %s38 = ssub.s32 %s25, %s37
      %p39 = scmp.eq.s32.totalorder %s38, 0
      %s41 = sadd.s32 %s40, 1
      %s42 = scalar_select %p39, %s40, %s41
      %p45 = pneg %p39
      %p46 = scmp.eq.s32.totalorder %s18, 1
      %p47 = por %p45, %p46
      %p48 = scmp.ne.s32.totalorder %s40, %s43
      %p49 = scmp.eq.s32.totalorder %s18, 0
      %p50 = por %p48, %p49
      %p51 = scmp.ne.s32.totalorder %s40, %s43
      %p52 = scmp.eq.s32.totalorder %s23, 1
      %p53 = por %p51, %p52
      %p54 = scmp.ne.s32.totalorder %s43, %s44
      %p55 = scmp.eq.s32.totalorder %s23, 0
      %p56 = por %p54, %p55
      %p57 = scmp.ne.s32.totalorder %s43, %s44
      %p58 = scmp.eq.s32.totalorder %s24, 1
      %p59 = por %p57, %p58
      %p61 = scmp.ne.s32.totalorder %s44, %s60
      %p62 = scmp.eq.s32.totalorder %s24, 0
      %p63 = por %p61, %p62
      %s64 = ssub.s32 %s25, %s37
      %s65 = ssub.s32 %s26, %s33
      %s66 = sor.u32 %s64, %s65
      %p67 = scmp.eq.s32.totalorder %s66, 0
      %s69 = sadd.s32 %s68, 1
      %s70 = scalar_select %p67, %s68, %s69
      %p73 = pneg %p67
      %p74 = scmp.eq.s32.totalorder %s18, 1
      %p75 = por %p73, %p74
      %p76 = scmp.ne.s32.totalorder %s68, %s71
      %p77 = scmp.eq.s32.totalorder %s18, 0
      %p78 = por %p76, %p77
      %p79 = scmp.ne.s32.totalorder %s68, %s71
      %p80 = scmp.eq.s32.totalorder %s23, 1
      %p81 = por %p79, %p80
      %p82 = scmp.ne.s32.totalorder %s71, %s72
      %p83 = scmp.eq.s32.totalorder %s23, 0
      %p84 = por %p82, %p83
      %p85 = scmp.ne.s32.totalorder %s71, %s72
      %p86 = scmp.eq.s32.totalorder %s24, 1
      %p87 = por %p85, %p86
      %p89 = scmp.ne.s32.totalorder %s72, %s88
      %p90 = scmp.eq.s32.totalorder %s24, 0
      %p91 = por %p89, %p90
      %s92 = ssub.s32 %s25, %s37
      %s93 = ssub.s32 %s26, %s33
      %s94 = sor.u32 %s92, %s93
      %p95 = scmp.eq.s32.totalorder %s94, 0
      %s97 = sadd.s32 %s96, 1
      %s98 = scalar_select %p95, %s96, %s97
      %p101 = pneg %p95
      %p102 = scmp.eq.s32.totalorder %s18, 1
      %p103 = por %p101, %p102
      %p104 = scmp.ne.s32.totalorder %s96, %s99
      %p105 = scmp.eq.s32.totalorder %s18, 0
      %p106 = por %p104, %p105
      %p107 = scmp.ne.s32.totalorder %s96, %s99
      %p108 = scmp.eq.s32.totalorder %s23, 1
      %p109 = por %p107, %p108
      %p110 = scmp.ne.s32.totalorder %s99, %s100
      %p111 = scmp.eq.s32.totalorder %s23, 0
      %p112 = por %p110, %p111
      %p113 = scmp.ne.s32.totalorder %s99, %s100
      %p114 = scmp.eq.s32.totalorder %s24, 1
      %p115 = por %p113, %p114
      %p117 = scmp.ne.s32.totalorder %s100, %s116
      %p118 = scmp.eq.s32.totalorder %s24, 0
      %p119 = por %p117, %p118
      %s120 = ssub.s32 %s25, %s37
      %p121 = scmp.eq.s32.totalorder %s120, 0
      %s123 = sadd.s32 %s122, 1
      %s124 = scalar_select %p121, %s122, %s123
      %p127 = pneg %p121
      %p128 = scmp.eq.s32.totalorder %s18, 1
      %p129 = por %p127, %p128
      %p130 = scmp.ne.s32.totalorder %s122, %s125
      %p131 = scmp.eq.s32.totalorder %s18, 0
      %p132 = por %p130, %p131
      %p133 = scmp.ne.s32.totalorder %s122, %s125
      %p134 = scmp.eq.s32.totalorder %s23, 1
      %p135 = por %p133, %p134
      %p136 = scmp.ne.s32.totalorder %s125, %s126
      %p137 = scmp.eq.s32.totalorder %s23, 0
      %p138 = por %p136, %p137
      %p139 = scmp.ne.s32.totalorder %s125, %s126
      %p140 = scmp.eq.s32.totalorder %s24, 1
      %p141 = por %p139, %p140
      %p143 = scmp.ne.s32.totalorder %s126, %s142
      %p144 = scmp.eq.s32.totalorder %s24, 0
      %p145 = por %p143, %p144
      %p146 = scmp.le.s32.totalorder 1, %s18
      %p147 = scmp.lt.s32.totalorder %s18, 3
      %p148 = pnand %p146, %p147
      %p149 = pneg %p148
      // Predicated region
      $region9: #{tpu_custom_call.1} parent=5 // pred_check
        _
      $region10: #{tpu_custom_call.1} parent=5 // pred_check_branch
        %151 = sbr.rel (%p148) target = $region12
      $region11: #{tpu_custom_call.1} parent=5 // pred_region
        %s152 = ssub.s32 %s18, 1
      $region12: #{tpu_custom_call.1} parent=5 // pred_fallthru
        _
      %p153 = scmp.lt.s32.totalorder %s18, 2
      // Predicated region
      $region13: #{tpu_custom_call.1} parent=5 // pred_check
        %p154 = pneg %p153
      $region14: #{tpu_custom_call.1} parent=5 // pred_check_branch
        %156 = sbr.rel (%p154) target = $region16
      $region15: #{tpu_custom_call.1} parent=5 // pred_region
        // Predicated region
        $region17: #{tpu_custom_call.1} parent=15 // pred_check
          %p157 = pneg %p50
        $region18: #{tpu_custom_call.1} parent=15 // pred_check_branch
          %159 = sbr.rel (%p157) target = $region20
        $region19: #{tpu_custom_call.1} parent=15 // pred_region
          %s160 = sand.u32 %s40, 1
          %s161 = scalar_lea.sflag [#allocation4], %s160
          %s162 = sand.u32 %s40, 1
          %s163 = smul.addr %s162, 2
          %s164 = scalar_lea.vmem [#allocation3], %s163
          %s166 = ssub.s32 32, 32
          %167 = vsyncadd %s161, %s166
          %s168 = smul.addr %s25, 32
          %s169 = scalar_lea.hbm %s0, %s168
          %s171 = sshll.u32 %s164, 4
          %s172 = int_to_ptr.vmem [resolvable:$true] %s171
          %174 = dma.hbm_to_vmem [thread:$0]  %s169, 32, %s172, %s161
        $region20: #{tpu_custom_call.1} parent=15 // pred_fallthru
          _
        // Predicated region
        $region21: #{tpu_custom_call.1} parent=15 // pred_check
          %p175 = pneg %p78
        $region22: #{tpu_custom_call.1} parent=15 // pred_check_branch
          %177 = sbr.rel (%p175) target = $region24
        $region23: #{tpu_custom_call.1} parent=15 // pred_region
          %s178 = sand.u32 %s68, 1
          %s179 = scalar_lea.sflag [#allocation7], %s178
          %s180 = sand.u32 %s68, 1
          %s181 = smul.addr %s180, 32
          %s182 = scalar_lea.vmem [#allocation6], %s181
          %s183 = smul.u32 2, %s26
          %s185 = ssub.s32 512, 512
          %186 = vsyncadd %s179, %s185
          %s187 = smul.addr %s25, 4
          %s188 = sadd.s32 %s183, %s187
          %s189 = smul.addr %s188, 128
          %s190 = scalar_lea.hbm %s1, %s189
          %s191 = sshll.u32 %s182, 4
          %s192 = int_to_ptr.vmem [resolvable:$true] %s191
          %197 = dma.hbm_to_vmem [thread:$0]  %s190, 512, %s192, %s179, 128, 128, 8
        $region24: #{tpu_custom_call.1} parent=15 // pred_fallthru
          _
        // Predicated region
        $region25: #{tpu_custom_call.1} parent=15 // pred_check
          %p198 = pneg %p106
        $region26: #{tpu_custom_call.1} parent=15 // pred_check_branch
          %200 = sbr.rel (%p198) target = $region28
        $region27: #{tpu_custom_call.1} parent=15 // pred_region
          %p201 = scmp.lt.s32.totalorder %s25, 1
          %s202 = scalar_select %p201, %s25, 1
          %p203 = scmp.lt.s32.totalorder %s26, 0
          %s204 = scalar_select %p203, %s26, 0
          %s205 = sadd.s32 %s204, %s202
          %s206 = scalar_lea.vmem %s2, %s205
        $region28: #{tpu_custom_call.1} parent=15 // pred_fallthru
          _
      $region16: #{tpu_custom_call.1} parent=5 // pred_fallthru
        _
      %p207 = scmp.le.s32.totalorder 1, %s18
      %p208 = scmp.lt.s32.totalorder %s18, 3
      %p209 = pnand %p207, %p208
      %p210 = pneg %p209
      // Predicated region
      $region29: #{tpu_custom_call.1} parent=5 // pred_check
        _
      $region30: #{tpu_custom_call.1} parent=5 // pred_check_branch
        %212 = sbr.rel (%p209) target = $region32
      $region31: #{tpu_custom_call.1} parent=5 // pred_region
        %s213 = ssub.s32 %s18, 1
        %s214 = sand.u32 %s43, 1
        %s215 = scalar_lea.sflag [#allocation4], %s214
        %s216 = sand.u32 %s43, 1
        %s217 = smul.addr %s216, 2
        %s218 = scalar_lea.vmem [#allocation3], %s217
        // Predicated region
        $region33: #{tpu_custom_call.1} parent=31 // pred_check
          %p219 = pneg %p56
        $region34: #{tpu_custom_call.1} parent=31 // pred_check_branch
          %221 = sbr.rel (%p219) target = $region36
        $region35: #{tpu_custom_call.1} parent=31 // pred_region
          %222 = dma.done %s215, 32
        $region36: #{tpu_custom_call.1} parent=31 // pred_fallthru
          _
        %s223 = sand.u32 %s71, 1
        %s224 = scalar_lea.sflag [#allocation7], %s223
        %s225 = sand.u32 %s71, 1
        %s226 = smul.addr %s225, 32
        %s227 = scalar_lea.vmem [#allocation6], %s226
        // Predicated region
        $region37: #{tpu_custom_call.1} parent=31 // pred_check
          %p228 = pneg %p84
        $region38: #{tpu_custom_call.1} parent=31 // pred_check_branch
          %230 = sbr.rel (%p228) target = $region40
        $region39: #{tpu_custom_call.1} parent=31 // pred_region
          %231 = dma.done %s224, 512
        $region40: #{tpu_custom_call.1} parent=31 // pred_fallthru
          _
        %s232 = sand.u32 %s43, 1
        %s233 = scalar_lea.sflag [#allocation4], %s232
        %s234 = sand.u32 %s43, 1
        %s235 = smul.addr %s234, 2
        %s236 = scalar_lea.vmem [#allocation3], %s235
        %p237 = pneg %p56
        %p238 = pneg %p53
        %s239 = sand.u32 %s71, 1
        %s240 = scalar_lea.sflag [#allocation7], %s239
        %s241 = sand.u32 %s71, 1
        %s242 = smul.addr %s241, 32
        %s243 = scalar_lea.vmem [#allocation6], %s242
        %p244 = pneg %p84
        %p245 = pneg %p81
        %p246 = scmp.lt.s32.totalorder %s27, 1
        %s247 = scalar_select %p246, %s27, 1
        %p248 = scmp.lt.s32.totalorder %s28, 0
        %s249 = scalar_select %p248, %s28, 0
        %s250 = sadd.s32 %s249, %s247
        %s251 = scalar_lea.vmem %s2, %s250
        %p252 = pneg %p112
        %p253 = pneg %p109
        %p254 = pneg %p138
        %p255 = pneg %p135
        %s256 = sand.u32 %s125, 1
        %s257 = scalar_lea.sflag [#allocation5], %s256
        %s258 = sand.u32 %s125, 1
        %s259 = smul.addr %s258, 2
        %s260 = scalar_lea.vmem [#allocation8], %s259
        %s261 = smul.u32 2, %s28
        %p262 = scmp.lt.s32.totalorder %s27, 1
        %s263 = scalar_select %p262, %s27, 1
        %p264 = scmp.lt.s32.totalorder %s28, 0
        %s265 = scalar_select %p264, %s28, 0
        %s266 = sadd.s32 %s265, %s263
        %s267 = scalar_lea.vmem %s2, %s266
        %v268 = vld [vmem:[%s218] sm:$0x3]
        %v269 = vld [vmem:[%s227] sm:$0xff]
        %v270 = vld [vmem:[%s227 + $0x8] sm:$0xff]
        %v271 = vld [vmem:[%s227 + $0x10] sm:$0xff]
        %v272 = vld [vmem:[%s227 + $0x18] sm:$0xff]
        %v275 = vunpack.c.l.s4 1966171168
        %v276 = vunpack.c.0.s8 %v275
        %v277 = vlaneseq
        %v278 = vshrl.u32 %v277, 7
        %v279 = vsub.s32 %v276, %v278
        %v280 = vrot.slane %v268, %v279
        %v281 = vcombine.high %v280, %v280
        %v283 = vunpack.c.l.s4 1966171168
        %v284 = vunpack.c.0.s8 %v283
        %v285 = vlaneseq
        %v286 = vshrl.u32 %v285, 7
        %v287 = vsub.s32 %v284, %v286
        %v288 = vrot.slane %v280, %v287
        %v290 = vunpack.c.l.s4 1966171168
        %v291 = vunpack.c.0.s8 %v290
        %v292 = vlaneseq
        %v293 = vshrl.u32 %v292, 7
        %v294 = vsub.s32 %v291, %v293
        %v295 = vrot.slane %v281, %v294
        %vm296 = vcmask 261120
        %v297 = vsel %vm296, %v288, 0
        %v300 = vsel %vm296, %v269, 0
        %v303 = vsel %vm296, %v270, 0
        %305 = vmatprep.subr.mxu0 0.0
        %306 = vmatpush1.xpose.msra.mxu0 %v300
        %307 = vmatprep.subr.mxu0 0.0
        %308 = vmatpush1.xpose.msra.mxu0 %v303
        %309 = vmatprep.subr.mxu0 0.0
        %310 = vmatpush1.xpose.msra.mxu0 0.0
        %311 = vmatprep.subr.mxu0 0.0
        %312 = vmatpush1.xpose.msra.mxu0 0.0
        %313 = vmatprep.subr.mxu0 0.0
        %314 = vmatpush1.xpose.msra.mxu0 0.0
        %315 = vmatprep.subr.mxu0 0.0
        %316 = vmatpush1.xpose.msra.mxu0 0.0
        %317 = vmatprep.subr.mxu0 0.0
        %318 = vmatpush1.xpose.msra.mxu0 0.0
        %319 = vmatprep.subr.mxu0 0.0
        %320 = vmatpush1.xpose.msra.mxu0 0.0
        %321 = vmatprep.subr.mxu0 0.0
        %322 = vmatpush1.xpose.msra.mxu0 0.0
        %323 = vmatprep.subr.mxu0 0.0
        %324 = vmatpush1.xpose.msra.mxu0 0.0
        %325 = vmatprep.subr.mxu0 0.0
        %326 = vmatpush1.xpose.msra.mxu0 0.0
        %327 = vmatprep.subr.mxu0 0.0
        %328 = vmatpush1.xpose.msra.mxu0 0.0
        %329 = vmatprep.subr.mxu0 0.0
        %330 = vmatpush1.xpose.msra.mxu0 0.0
        %331 = vmatprep.subr.mxu0 0.0
        %332 = vmatpush1.xpose.msra.mxu0 0.0
        %333 = vmatprep.subr.mxu0 0.0
        %334 = vmatpush1.xpose.msra.mxu0 0.0
        %335 = vmatprep.subr.mxu0 0.0
        %336 = vmatpush1.xpose.msra.mxu0 0.0
        %337 = vmatprep.subr.mxu0 0.0
        %338 = vmatpush1.xpose.msra.mxu0 0.0
        %339 = vmatprep.subr.mxu0 0.0
        %340 = vmatpush1.xpose.msra.mxu0 0.0
        %341 = vmatprep.subr.mxu0 0.0
        %342 = vmatpush1.xpose.msra.mxu0 0.0
        %343 = vmatprep.subr.mxu0 0.0
        %344 = vmatpush1.xpose.msra.mxu0 0.0
        %345 = vmatprep.subr.mxu0 0.0
        %346 = vmatpush1.xpose.msra.mxu0 0.0
        %347 = vmatprep.subr.mxu0 0.0
        %348 = vmatpush1.xpose.msra.mxu0 0.0
        %349 = vmatprep.subr.mxu0 0.0
        %350 = vmatpush1.xpose.msra.mxu0 0.0
        %351 = vmatprep.subr.mxu0 0.0
        %352 = vmatpush1.xpose.msra.mxu0 0.0
        %353 = vmatprep.subr.mxu0 0.0
        %354 = vmatpush1.xpose.msra.mxu0 0.0
        %355 = vmatprep.subr.mxu0 0.0
        %356 = vmatpush1.xpose.msra.mxu0 0.0
        %357 = vmatprep.subr.mxu0 0.0
        %358 = vmatpush1.xpose.msra.mxu0 0.0
        %359 = vmatprep.subr.mxu0 0.0
        %360 = vmatpush1.xpose.msra.mxu0 0.0
        %361 = vmatprep.subr.mxu0 0.0
        %362 = vmatpush1.xpose.msra.mxu0 0.0
        %363 = vmatprep.subr.mxu0 0.0
        %364 = vmatpush1.xpose.msra.mxu0 0.0
        %365 = vmatprep.subr.mxu0 0.0
        %366 = vmatpush1.xpose.msra.mxu0 0.0
        %367 = vmatprep.subr.mxu0 0.0
        %368 = vmatpush1.xpose.msra.mxu0 0.0
        %369 = vmatprep.mubr.f32.mxu0 0.0
        %370 = vmatmul.mubr.f32.gmra.mrb[0].mxu0 %v297
        %v371 = vpop.f32.mrb[0].mxu0
        %v372 = vadd.f32 0.0, %v371
        %v373 = vpop.f32.mrb[0].mxu0
        %374 = vdwg.mxu0
        %v375 = vsel %vm296, %v295, 0
        %v378 = vsel %vm296, %v271, 0
        %v381 = vsel %vm296, %v272, 0
        %383 = vmatprep.subr.mxu0 0.0
        %384 = vmatpush1.xpose.msra.mxu0 %v378
        %385 = vmatprep.subr.mxu0 0.0
        %386 = vmatpush1.xpose.msra.mxu0 %v381
        %387 = vmatprep.subr.mxu0 0.0
        %388 = vmatpush1.xpose.msra.mxu0 0.0
        %389 = vmatprep.subr.mxu0 0.0
        %390 = vmatpush1.xpose.msra.mxu0 0.0
        %391 = vmatprep.subr.mxu0 0.0
        %392 = vmatpush1.xpose.msra.mxu0 0.0
        %393 = vmatprep.subr.mxu0 0.0
        %394 = vmatpush1.xpose.msra.mxu0 0.0
        %395 = vmatprep.subr.mxu0 0.0
        %396 = vmatpush1.xpose.msra.mxu0 0.0
        %397 = vmatprep.subr.mxu0 0.0
        %398 = vmatpush1.xpose.msra.mxu0 0.0
        %399 = vmatprep.subr.mxu0 0.0
        %400 = vmatpush1.xpose.msra.mxu0 0.0
        %401 = vmatprep.subr.mxu0 0.0
        %402 = vmatpush1.xpose.msra.mxu0 0.0
        %403 = vmatprep.subr.mxu0 0.0
        %404 = vmatpush1.xpose.msra.mxu0 0.0
        %405 = vmatprep.subr.mxu0 0.0
        %406 = vmatpush1.xpose.msra.mxu0 0.0
        %407 = vmatprep.subr.mxu0 0.0
        %408 = vmatpush1.xpose.msra.mxu0 0.0
        %409 = vmatprep.subr.mxu0 0.0
        %410 = vmatpush1.xpose.msra.mxu0 0.0
        %411 = vmatprep.subr.mxu0 0.0
        %412 = vmatpush1.xpose.msra.mxu0 0.0
        %413 = vmatprep.subr.mxu0 0.0
        %414 = vmatpush1.xpose.msra.mxu0 0.0
        %415 = vmatprep.subr.mxu0 0.0
        %416 = vmatpush1.xpose.msra.mxu0 0.0
        %417 = vmatprep.subr.mxu0 0.0
        %418 = vmatpush1.xpose.msra.mxu0 0.0
        %419 = vmatprep.subr.mxu0 0.0
        %420 = vmatpush1.xpose.msra.mxu0 0.0
        %421 = vmatprep.subr.mxu0 0.0
        %422 = vmatpush1.xpose.msra.mxu0 0.0
        %423 = vmatprep.subr.mxu0 0.0
        %424 = vmatpush1.xpose.msra.mxu0 0.0
        %425 = vmatprep.subr.mxu0 0.0
        %426 = vmatpush1.xpose.msra.mxu0 0.0
        %427 = vmatprep.subr.mxu0 0.0
        %428 = vmatpush1.xpose.msra.mxu0 0.0
        %429 = vmatprep.subr.mxu0 0.0
        %430 = vmatpush1.xpose.msra.mxu0 0.0
        %431 = vmatprep.subr.mxu0 0.0
        %432 = vmatpush1.xpose.msra.mxu0 0.0
        %433 = vmatprep.subr.mxu0 0.0
        %434 = vmatpush1.xpose.msra.mxu0 0.0
        %435 = vmatprep.subr.mxu0 0.0
        %436 = vmatpush1.xpose.msra.mxu0 0.0
        %437 = vmatprep.subr.mxu0 0.0
        %438 = vmatpush1.xpose.msra.mxu0 0.0
        %439 = vmatprep.subr.mxu0 0.0
        %440 = vmatpush1.xpose.msra.mxu0 0.0
        %441 = vmatprep.subr.mxu0 0.0
        %442 = vmatpush1.xpose.msra.mxu0 0.0
        %443 = vmatprep.subr.mxu0 0.0
        %444 = vmatpush1.xpose.msra.mxu0 0.0
        %445 = vmatprep.subr.mxu0 0.0
        %446 = vmatpush1.xpose.msra.mxu0 0.0
        %447 = vmatprep.mubr.f32.mxu0 0.0
        %448 = vmatmul.mubr.f32.gmra.mrb[0].mxu0 %v375
        %v449 = vpop.f32.mrb[0].mxu0
        %v450 = vadd.f32 0.0, %v449
        %v451 = vpop.f32.mrb[0].mxu0
        %452 = vdwg.mxu0
        %v453 = vmul.f32 %v372, 0.17677669
        %v454 = vmul.f32 %v450, 0.17677669
        %v455 = vld [vmem:[%s267] sm:$0x1]
        %vm456 = vcmp.ne.s32.totalorder %v455, 0
        %v457 = vsel %vm456, 1, 0
        %v458 = vlaneseq
        %v459 = vshrl.u32 %v458, 7
        %v460 = vsub.s32 0, %v459
        %v461 = vrot.slane %v457, %v460
        %vm462 = vcmp.eq.s32.totalorder %v461, 1
        %v465 = vrot.slane %v454, 7
        %vm466 = vcmask 1041409
        %v467 = vsel %vm466, %v465, %v453
        %v469 = vsel %vm462, %v467, -1e+20
        %s470 = smul.u32 %s28, 2
        %s471 = scalar_lea.vmem [#allocation2], %s470
        %vm472 = vcmask 123904
        %473 = vst.msk [vmem:[%s471] sm:$0x3] %vm472, %v469
        %p474 = scmp.eq.s32.totalorder %s28, 0
        // Predicated region
        $region41: #{tpu_custom_call.1} parent=31 // pred_check
          %p475 = pneg %p474
        $region42: #{tpu_custom_call.1} parent=31 // pred_check_branch
          %477 = sbr.rel (%p475) target = $region44
        $region43: #{tpu_custom_call.1} parent=31 // pred_region
          %v478 = vld [vmem:[#allocation2] sm:$0x3]
          %v479 = vsel %vm472, %v478, -inf
          %480 = vmax.xlane.f32.xlu0 %v479
          %v481 = vpop.xlane.xlu0 %480
          %v482 = vsub.f32 %v478, %v481
          %v483 = vmul.f32 %v482, 1.442695
          %v484 = vpow.pop %v483
          %v485 = vsel %vm472, %v484, 0.0
          %486 = vadd.xlane.f32.xlu0 %v485
          %v487 = vpop.xlane.xlu0 %486
          %v488 = vadd.f32 %v487, 0.0
          %v489 = vmul.f32 %v488, 0.05
          %vm490 = vcmp.gt.f32.partialorder %v484, %v489
          %v491 = vlaneseq
          %v492 = vand.u32 %v491, 127
          %vm493 = vcmp.eq.s32.totalorder %v492, 15
          %vm494 = vmand 1, %vm493
          %vm495 = vmor %vm490, %vm494
          %v496 = vsel %vm495, 1, 0
          %497 = vst.msk [vmem:[%s260] sm:$0x3] %vm472, %v496
        $region44: #{tpu_custom_call.1} parent=31 // pred_fallthru
          _
        %s498 = sand.u32 %s125, 1
        %s499 = scalar_lea.sflag [#allocation5], %s498
        %s500 = sand.u32 %s125, 1
        %s501 = smul.addr %s500, 2
        %s502 = scalar_lea.vmem [#allocation8], %s501
        // Predicated region
        $region45: #{tpu_custom_call.1} parent=31 // pred_check
          %p503 = pneg %p135
        $region46: #{tpu_custom_call.1} parent=31 // pred_check_branch
          %505 = sbr.rel (%p503) target = $region48
        $region47: #{tpu_custom_call.1} parent=31 // pred_region
          %s507 = ssub.s32 32, 32
          %508 = vsyncadd %s499, %s507
          %s509 = smul.addr %s27, 32
          %s510 = scalar_lea.hbm %s3, %s509
          %s512 = sshll.u32 %s502, 4
          %s513 = int_to_ptr.vmem [resolvable:$true] %s512
          %515 = dma.vmem_to_hbm [thread:$0]  %s513, 32, %s510, %s499
        $region48: #{tpu_custom_call.1} parent=31 // pred_fallthru
          _
      $region32: #{tpu_custom_call.1} parent=5 // pred_fallthru
        _
      %p516 = scmp.le.s32.totalorder 2, %s18
      // Predicated region
      $region49: #{tpu_custom_call.1} parent=5 // pred_check
        %p517 = pneg %p516
      $region50: #{tpu_custom_call.1} parent=5 // pred_check_branch
        %519 = sbr.rel (%p517) target = $region52
      $region51: #{tpu_custom_call.1} parent=5 // pred_region
        %s520 = ssub.s32 %s18, 2
        // Predicated region
        $region53: #{tpu_custom_call.1} parent=51 // pred_check
          %p521 = pneg %p141
        $region54: #{tpu_custom_call.1} parent=51 // pred_check_branch
          %523 = sbr.rel (%p521) target = $region56
        $region55: #{tpu_custom_call.1} parent=51 // pred_region
          %s524 = sand.u32 %s126, 1
          %s525 = scalar_lea.sflag [#allocation5], %s524
          %s526 = sand.u32 %s126, 1
          %s527 = smul.addr %s526, 2
          %s528 = scalar_lea.vmem [#allocation8], %s527
          %529 = dma.done %s525, 32
        $region56: #{tpu_custom_call.1} parent=51 // pred_fallthru
          _
      $region52: #{tpu_custom_call.1} parent=5 // pred_fallthru
        _
    $region6: #{tpu_custom_call.1} parent=1 // loop_footer
      %s22 = sadd.s32 1, %s18
    $region7: #{tpu_custom_call.1} parent=1 // loop_footer_branch
      %17 = sbr.rel target = $region3
    $region8: #{tpu_custom_call.1} parent=1 // loop_exit
      _
    %530 = vsyncpa [#allocation4], 1
    %s531 = scalar_lea.sflag [#allocation4], 1
    %532 = vsyncpa %s531, 1
    %533 = vsyncpa [#allocation7], 1
    %s534 = scalar_lea.sflag [#allocation7], 1
    %535 = vsyncpa %s534, 1
    %536 = vsyncpa [#allocation5], 1
    %s537 = scalar_lea.sflag [#allocation5], 1
    %538 = vsyncpa %s537, 1

</llo_original>
